<compile_context>
chip_gen: v6e
topology: v6e:2x2x1
jax: 0.10.0
libtpu: 0.0.40
codegen_flags: <defaults>
</compile_context>

<pallas_src>
import functools

import numpy as np
import jax
import jax.numpy as jnp
from jax.experimental import pallas as pl
from jax.experimental.pallas import tpu as pltpu


# --------------------------------------------------------------------------
# Cache construction (mirrors the torch module's __init__ buffers)
# --------------------------------------------------------------------------
def init_rotary_cache(dim, max_seq_len, base=10000.0):
    inv_freq = 1.0 / (base ** (jnp.arange(0, dim, 2, dtype=jnp.float32) / dim))
    t = jnp.arange(max_seq_len, dtype=jnp.float32)
    freqs = jnp.einsum("i,j->ij", t, inv_freq)           # (max_seq_len, dim//2)
    emb = jnp.concatenate([freqs, freqs], axis=-1)       # (max_seq_len, dim)
    return jnp.cos(emb), jnp.sin(emb)                    # float32


@functools.lru_cache(maxsize=None)
def _rotate_half_matrix(dim, n_pack, dtype_name):
    """Block-diag R with n_pack copies s.t. x @ R == rotate_half(x) per D-group."""
    half = dim // 2
    j = np.arange(dim)
    src = np.where(j < half, 2 * j + 1, 2 * (j - half))
    sign = np.where(j < half, -1.0, 1.0).astype(np.float32)
    r = np.zeros((dim, dim), np.float32)
    r[src, j] = sign
    rot = np.kron(np.eye(n_pack, dtype=np.float32), r)   # (n_pack*dim, n_pack*dim)
    return jnp.asarray(rot, dtype=jnp.dtype(dtype_name))


# --------------------------------------------------------------------------
# Kernel
# --------------------------------------------------------------------------
def _rope_kernel(x_ref, cos_ref, sin_ref, rot_ref, o_ref, *, precision):
    # x_ref/o_ref: (t_bh, t_s, Dp); cos_ref/sin_ref: (t_s, Dp) f32; rot: (Dp, Dp)
    t_bh, t_s, d = x_ref.shape
    x = x_ref[...]
    # rotate_half as a single signed-permutation matmul over the whole slab.
    x_rot = jnp.dot(
        x.reshape(t_bh * t_s, d),
        rot_ref[...],
        preferred_element_type=jnp.float32,
        precision=precision,
    ).reshape(t_bh, t_s, d)
    out = x.astype(jnp.float32) * cos_ref[...][None] + x_rot * sin_ref[...][None]
    o_ref[...] = out.astype(o_ref.dtype)


# --------------------------------------------------------------------------
# Tile helpers
# --------------------------------------------------------------------------
def _pick_tile(total, target, mult):
    """Largest tile <= target that is a multiple of `mult` and divides `total`,
    or the full extent (always a legal block) when nothing else works."""
    if total <= target:
        return total
    t = (target // mult) * mult
    while t >= mult:
        if total % t == 0:
            return t
        t -= mult
    return total


# --------------------------------------------------------------------------
# Wrapper
# --------------------------------------------------------------------------
def rotary_embedding(x, cos_cached, sin_cached, *, block_bh=8, block_s=512,
                     vmem_budget_bytes=20 * 1024 * 1024, donate=False):
    """x: (B, H, S, D). cos_cached/sin_cached: (max_seq_len, D) float32."""
    B, H, S, D = x.shape
    max_seq_len = cos_cached.shape[0]
    if S > max_seq_len:
        raise ValueError(
            f"Input sequence length ({S}) exceeds maximum sequence length "
            f"({max_seq_len}) for RotaryEmbedding."
        )

    cos = cos_cached[:S].astype(jnp.float32)              # (S, D)
    sin = sin_cached[:S].astype(jnp.float32)

    BH = B * H
    itemsize = jnp.dtype(x.dtype).itemsize

    # Lane packing: if D < 128, fold k consecutive seq positions onto the lane
    # axis.  (BH, S, D) -> (BH, S//k, k*D) is a pure contiguous reshape.
    if D < 128 and 128 % D == 0 and S % (128 // D) == 0:
        k = 128 // D
    else:
        k = 1
    Dp = k * D
    S_eff = S // k

    x2 = x.reshape(BH, S_eff, Dp)
    cos2 = cos.reshape(S_eff, Dp)
    sin2 = sin.reshape(S_eff, Dp)
    rot = _rotate_half_matrix(D, k, jnp.dtype(x.dtype).name)   # (Dp, Dp)

    # --- tile selection --------------------------------------------------
    sub_mult = max(8, 32 // itemsize)          # 8 f32, 16 bf16, 32 int8/fp8
    t_bh = _pick_tile(BH, block_bh, 1)
    t_s = _pick_tile(S_eff, block_s, sub_mult)

    def footprint(tb, ts):
        slab = tb * ts * Dp * itemsize                     # x / out slab
        cs = ts * Dp * 4                                   # cos / sin (f32)
        return 2 * 2 * slab + 2 * 2 * cs + 2 * Dp * Dp * itemsize

    while footprint(t_bh, t_s) > vmem_budget_bytes and t_bh > 1:
        t_bh = _pick_tile(BH, max(1, t_bh // 2), 1)
    while footprint(t_bh, t_s) > vmem_budget_bytes and t_s > sub_mult:
        nt = _pick_tile(S_eff, max(sub_mult, t_s // 2), sub_mult)
        if nt >= t_s:
            break
        t_s = nt

    n_bh = BH // t_bh
    n_s = S_eff // t_s

    # Keep both v7x TensorCores busy if the whole problem fit in one block.
    if n_bh == 1 and n_s == 1 and BH > 1:
        t_bh = _pick_tile(BH, max(1, (BH + 1) // 2), 1)
        n_bh = BH // t_bh

    precision = (jax.lax.Precision.HIGHEST
                 if x.dtype == jnp.float32 else jax.lax.Precision.DEFAULT)

    cost = pl.CostEstimate(
        flops=2 * BH * S_eff * Dp * Dp,
        transcendentals=0,
        bytes_accessed=2 * x2.size * itemsize
        + (cos2.size + sin2.size) * 4
        + rot.size * itemsize,
    )

    # Grid: seq OUTER, BH INNER -> cos/sin block index constant across the
    # inner loop, so their HBM->VMEM DMA is skipped on repeated steps.
    grid = (n_s, n_bh)

    out = pl.pallas_call(
        functools.partial(_rope_kernel, precision=precision),
        out_shape=jax.ShapeDtypeStruct((BH, S_eff, Dp), x.dtype),
        grid_spec=pltpu.PrefetchScalarGridSpec(
            num_scalar_prefetch=0,
            grid=grid,
            in_specs=[
                pl.BlockSpec((t_bh, t_s, Dp), lambda j, i: (i, j, 0)),  # x slab
                pl.BlockSpec((t_s, Dp), lambda j, i: (j, 0)),           # cos rows
                pl.BlockSpec((t_s, Dp), lambda j, i: (j, 0)),           # sin rows
                pl.BlockSpec((Dp, Dp), lambda j, i: (0, 0)),            # rot
            ],
            out_specs=pl.BlockSpec((t_bh, t_s, Dp), lambda j, i: (i, j, 0)),
        ),
        compiler_params=pltpu.CompilerParams(
            dimension_semantics=("parallel", "parallel"),
            vmem_limit_bytes=32 * 1024 * 1024,
        ),
        cost_estimate=cost,
        input_output_aliases=({0: 0} if donate else {}),
    )(x2, cos2, sin2, rot)

    return out.reshape(B, H, S, D)


# --------------------------------------------------------------------------
# Pure-JAX reference (mirrors torch forward exactly)
# --------------------------------------------------------------------------
def rope_reference(x, cos_cached, sin_cached):
    S = x.shape[-2]
    cos = cos_cached[:S][None, None]
    sin = sin_cached[:S][None, None]
    x1 = x[..., 0::2]
    x2 = x[..., 1::2]
    rotated = jnp.concatenate([-x2, x1], axis=-1)
    return x * cos + rotated * sin


if __name__ == "__main__":
    batch, heads, seq, dim, max_seq_len = 2, 4, 8, 32, 16

    key = jax.random.PRNGKey(0)
    x = jax.random.normal(key, (batch, heads, seq, dim), jnp.float32)
    cos_cached, sin_cached = init_rotary_cache(dim, max_seq_len)

    y = rotary_embedding(x, cos_cached, sin_cached)
    jax.block_until_ready(y)

    y_ref = rope_reference(x, cos_cached, sin_cached)
    assert y.shape == (batch, heads, seq, dim)
    assert jnp.allclose(y, y_ref, atol=1e-5, rtol=1e-5)

    print("KERNEL_OK")
</pallas_src>

<mosaic_0001>
module attributes {stable_mosaic.version = 11 : i64} {
  func.func @_rope_kernel(%arg0: i32, %arg1: i32, %arg2: memref<4x2x128xf32, #tpu.memory_space<vmem>>, %arg3: memref<2x128xf32, #tpu.memory_space<vmem>>, %arg4: memref<2x128xf32, #tpu.memory_space<vmem>>, %arg5: memref<128x128xf32, #tpu.memory_space<vmem>>, %arg6: memref<4x2x128xf32, #tpu.memory_space<vmem>>) attributes {dimension_semantics = [#tpu.dimension_semantics<parallel>, #tpu.dimension_semantics<parallel>], iteration_bounds = array<i64: 1, 2>, scalar_prefetch = 0 : i64, scratch_operands = 0 : i64, tpu.core_type = #tpu.core_type<tc>, window_params = [{transform_indices = @transform_0, window_bounds = array<i64: 4, 2, 128>}, {transform_indices = @transform_1, window_bounds = array<i64: 2, 128>}, {transform_indices = @transform_2, window_bounds = array<i64: 2, 128>}, {pipeline_mode = #tpu.pipeline_mode<synchronous>, transform_indices = @transform_3, window_bounds = array<i64: 128, 128>}, {transform_indices = @transform_4, window_bounds = array<i64: 4, 2, 128>}]} {
    %c0 = arith.constant 0 : index
    %c0_0 = arith.constant 0 : index
    %c0_1 = arith.constant 0 : index
    %0 = vector.load %arg2[%c0, %c0_0, %c0_1] : memref<4x2x128xf32, #tpu.memory_space<vmem>>, vector<4x2x128xf32>
    %1 = vector.shape_cast %0 : vector<4x2x128xf32> to vector<8x128xf32>
    %c0_2 = arith.constant 0 : index
    %c0_3 = arith.constant 0 : index
    %2 = vector.load %arg5[%c0_2, %c0_3] : memref<128x128xf32, #tpu.memory_space<vmem>>, vector<128x128xf32>
    %cst = arith.constant dense<0.000000e+00> : vector<8x128xf32>
    %3 = tpu.matmul %1, %2, %cst {dimension_numbers = #tpu.dot_dimension_numbers<[1], [0], [0], [1], [0, 0, 1, 1], [], []>, precision = #tpu.contract_precision<fp32>} : vector<8x128xf32>, vector<128x128xf32>, vector<8x128xf32> -> vector<8x128xf32>
    %4 = vector.shape_cast %3 : vector<8x128xf32> to vector<4x2x128xf32>
    %c0_4 = arith.constant 0 : index
    %c0_5 = arith.constant 0 : index
    %5 = vector.load %arg3[%c0_4, %c0_5] : memref<2x128xf32, #tpu.memory_space<vmem>>, vector<2x128xf32>
    %6 = vector.shape_cast %5 : vector<2x128xf32> to vector<1x2x128xf32>
    %7 = vector.broadcast %6 : vector<1x2x128xf32> to vector<4x2x128xf32>
    %8 = arith.mulf %0, %7 : vector<4x2x128xf32>
    %c0_6 = arith.constant 0 : index
    %c0_7 = arith.constant 0 : index
    %9 = vector.load %arg4[%c0_6, %c0_7] : memref<2x128xf32, #tpu.memory_space<vmem>>, vector<2x128xf32>
    %10 = vector.shape_cast %9 : vector<2x128xf32> to vector<1x2x128xf32>
    %11 = vector.broadcast %10 : vector<1x2x128xf32> to vector<4x2x128xf32>
    %12 = arith.mulf %4, %11 : vector<4x2x128xf32>
    %13 = arith.addf %8, %12 : vector<4x2x128xf32>
    %c0_8 = arith.constant 0 : index
    %c0_9 = arith.constant 0 : index
    %c0_10 = arith.constant 0 : index
    %14 = vector.load %arg6[%c0_8, %c0_9, %c0_10] : memref<4x2x128xf32, #tpu.memory_space<vmem>>, vector<4x2x128xf32>
    tpu.vector_store %arg6[%c0_8, %c0_9, %c0_10], %13 {strides = array<i32>} : memref<4x2x128xf32, #tpu.memory_space<vmem>>, vector<4x2x128xf32>,
    return
  }
  func.func @transform_0(%arg0: i32, %arg1: i32) -> (i32, i32, i32) {
    %c0_i32 = arith.constant 0 : i32
    %c0_i32_0 = arith.constant 0 : i32
    return %arg1, %arg0, %c0_i32 : i32, i32, i32
  }
  func.func @transform_1(%arg0: i32, %arg1: i32) -> (i32, i32) {
    %c0_i32 = arith.constant 0 : i32
    %c0_i32_0 = arith.constant 0 : i32
    return %arg0, %c0_i32 : i32, i32
  }
  func.func @transform_2(%arg0: i32, %arg1: i32) -> (i32, i32) {
    %c0_i32 = arith.constant 0 : i32
    %c0_i32_0 = arith.constant 0 : i32
    return %arg0, %c0_i32 : i32, i32
  }
  func.func @transform_3(%arg0: i32, %arg1: i32) -> (i32, i32) {
    %c0_i32 = arith.constant 0 : i32
    %c0_i32_0 = arith.constant 0 : i32
    %c0_i32_1 = arith.constant 0 : i32
    return %c0_i32, %c0_i32_0 : i32, i32
  }
  func.func @transform_4(%arg0: i32, %arg1: i32) -> (i32, i32, i32) {
    %c0_i32 = arith.constant 0 : i32
    %c0_i32_0 = arith.constant 0 : i32
    return %arg1, %arg0, %c0_i32 : i32, i32, i32
  }
}

</mosaic_0001>

<llo_original>
// kernel: tpu_custom_call.1
$region0: #{tpu_custom_call.1}
  #allocation0 [shape = 'u32[]', space=smem, size = 0x4, offset = 0x4, fixed_abs, tag = 'smem constant byte address 0x4 - core index']
  #allocation1 [shape = 'u32[144,128]{1,0:T(1,128)}', space=vmem, size = 0x12000, scoped, tag = 'internal scratch']
  %s0 = inlined_call_operand.hbm [shape: f32[8,2,128], index: 0, kind: input, shape index: {}]
  %s1 = inlined_call_operand.hbm [shape: f32[2,128], index: 1, kind: input, shape index: {}]
  %s2 = inlined_call_operand.vmem [shape: f32[2,128], index: 2, kind: input, shape index: {}]
  %s3 = inlined_call_operand.hbm [shape: f32[128,128], index: 3, kind: input, shape index: {}]
  %s4 = inlined_call_operand.hbm [shape: f32[8,2,128], index: 4, kind: output, shape index: {}]
  %s5 = sld [smem:[#allocation0]]
  $region61: #{tpu_custom_call.1} parent=0
    _
  %s7 = ssub.s32 1, %s5
  %s8 = scalar_select 0, %s7, %s5
  $region1: #{tpu_custom_call.1} parent=0
    #allocation2 [shape = 'u8[8192]{0}', space=vmem, size = 0x2000, scoped, tag = 'input window, operand 0']
    #allocation3 [shape = 's32[2]{0}', space=sflag, size = 0x8, scoped, tag = 'scoped memory for tpu_custom_call.1']
    #allocation4 [shape = 's32[2]{0}', space=sflag, size = 0x8, scoped, tag = 'scoped memory for tpu_custom_call.1']
    #allocation5 [shape = 'u8[1024]{0}', space=vmem, size = 0x400, scoped, tag = 'input window, operand 1, single buffered']
    #allocation6 [shape = 's32[1]{0}', space=sflag, size = 0x4, scoped, tag = 'scoped memory for tpu_custom_call.1']
    #allocation7 [shape = 'u8[65536]{0}', space=vmem, size = 0x10000, scoped, tag = 'input window, operand 3, single buffered']
    #allocation8 [shape = 'u8[8192]{0}', space=vmem, size = 0x2000, scoped, tag = 'output window, operand 0']
    %9 = vsyncpa [#allocation3], 0
    %s10 = scalar_lea.sflag [#allocation3], 1
    %11 = vsyncpa %s10, 0
    %12 = vsyncpa [#allocation6], 0
    %13 = vsyncpa [#allocation4], 0
    %s14 = scalar_lea.sflag [#allocation4], 1
    %15 = vsyncpa %s14, 0
    loop: start=0, step=1, limit=4
    $region2: #{tpu_custom_call.1} parent=1 // loop_pre_header
      _
    $region3: #{tpu_custom_call.1} parent=1 // loop_header
      %s17 = sphi 0, %s21
      %p18 = scmp.ge.s32.totalorder %s17, 4
      %s24 = sphi 0, %s36
      %s25 = sphi 0, %s32
      %s26 = sphi 0, %s24
      %s27 = sphi 0, %s25
      %s28 = sphi 0, %s26
      %s29 = sphi 0, %s27
      %s41 = sphi 0, %s43
      %s44 = sphi 0, %s41
      %s45 = sphi 0, %s44
      %s61 = sphi 0, %s45
      %s67 = sphi 0, %s69
      %s70 = sphi 0, %s67
      %s71 = sphi 0, %s70
      %s87 = sphi 0, %s71
      %s93 = sphi 0, %s95
      %s96 = sphi 0, %s93
      %s97 = sphi 0, %s96
      %s113 = sphi 0, %s97
      %s117 = sphi 0, %s117
      %s119 = sphi 0, %s117
      %s120 = sphi 0, %s119
      %s134 = sphi 0, %s120
      %s142 = sphi 0, %s144
      %s145 = sphi 0, %s142
      %s146 = sphi 0, %s145
      %s162 = sphi 0, %s146
    $region4: #{tpu_custom_call.1} parent=1 // loop_header_branch
      %20 = sbr.rel (%p18) target = $region8
    $region5: #{tpu_custom_call.1} parent=1 // loop_body
      %s22 = ssub.s32 %s17, 1
      %s23 = ssub.s32 %s17, 2
      %s30 = sadd.s32 1, %s25
      %p31 = scmp.ge.s32.totalorder %s30, 2
      %s32 = scalar_select %p31, 0, %s30
      %s33 = sadd.s32 1, %s24
      %s34 = scalar_select %p31, %s33, %s24
      %p35 = scmp.ge.s32.totalorder %s34, 1
      %s36 = scalar_select %p35, 0, %s34
      %s37 = ssub.s32 %s25, %s32
      %s38 = ssub.s32 %s24, %s36
      %s39 = sor.u32 %s37, %s38
      %p40 = scmp.eq.s32.totalorder %s39, 0
      %s42 = sadd.s32 %s41, 1
      %s43 = scalar_select %p40, %s41, %s42
      %p46 = pneg %p40
      %p47 = scmp.eq.s32.totalorder %s17, 1
      %p48 = por %p46, %p47
      %p49 = scmp.ne.s32.totalorder %s41, %s44
      %p50 = scmp.eq.s32.totalorder %s17, 0
      %p51 = por %p49, %p50
      %p52 = scmp.ne.s32.totalorder %s41, %s44
      %p53 = scmp.eq.s32.totalorder %s22, 1
      %p54 = por %p52, %p53
      %p55 = scmp.ne.s32.totalorder %s44, %s45
      %p56 = scmp.eq.s32.totalorder %s22, 0
      %p57 = por %p55, %p56
      %p58 = scmp.ne.s32.totalorder %s44, %s45
      %p59 = scmp.eq.s32.totalorder %s23, 1
      %p60 = por %p58, %p59
      %p62 = scmp.ne.s32.totalorder %s45, %s61
      %p63 = scmp.eq.s32.totalorder %s23, 0
      %p64 = por %p62, %p63
      %s65 = ssub.s32 %s24, %s36
      %p66 = scmp.eq.s32.totalorder %s65, 0
      %s68 = sadd.s32 %s67, 1
      %s69 = scalar_select %p66, %s67, %s68
      %p72 = pneg %p66
      %p73 = scmp.eq.s32.totalorder %s17, 1
      %p74 = por %p72, %p73
      %p75 = scmp.ne.s32.totalorder %s67, %s70
      %p76 = scmp.eq.s32.totalorder %s17, 0
      %p77 = por %p75, %p76
      %p78 = scmp.ne.s32.totalorder %s67, %s70
      %p79 = scmp.eq.s32.totalorder %s22, 1
      %p80 = por %p78, %p79
      %p81 = scmp.ne.s32.totalorder %s70, %s71
      %p82 = scmp.eq.s32.totalorder %s22, 0
      %p83 = por %p81, %p82
      %p84 = scmp.ne.s32.totalorder %s70, %s71
      %p85 = scmp.eq.s32.totalorder %s23, 1
      %p86 = por %p84, %p85
      %p88 = scmp.ne.s32.totalorder %s71, %s87
      %p89 = scmp.eq.s32.totalorder %s23, 0
      %p90 = por %p88, %p89
      %s91 = ssub.s32 %s24, %s36
      %p92 = scmp.eq.s32.totalorder %s91, 0
      %s94 = sadd.s32 %s93, 1
      %s95 = scalar_select %p92, %s93, %s94
      %p98 = pneg %p92
      %p99 = scmp.eq.s32.totalorder %s17, 1
      %p100 = por %p98, %p99
      %p101 = scmp.ne.s32.totalorder %s93, %s96
      %p102 = scmp.eq.s32.totalorder %s17, 0
      %p103 = por %p101, %p102
      %p104 = scmp.ne.s32.totalorder %s93, %s96
      %p105 = scmp.eq.s32.totalorder %s22, 1
      %p106 = por %p104, %p105
      %p107 = scmp.ne.s32.totalorder %s96, %s97
      %p108 = scmp.eq.s32.totalorder %s22, 0
      %p109 = por %p107, %p108
      %p110 = scmp.ne.s32.totalorder %s96, %s97
      %p111 = scmp.eq.s32.totalorder %s23, 1
      %p112 = por %p110, %p111
      %p114 = scmp.ne.s32.totalorder %s97, %s113
      %p115 = scmp.eq.s32.totalorder %s23, 0
      %p116 = por %p114, %p115
      %s118 = sadd.s32 %s117, 1
      %p121 = scmp.eq.s32.totalorder %s17, 1
      %p122 = scmp.ne.s32.totalorder %s117, %s119
      %p123 = scmp.eq.s32.totalorder %s17, 0
      %p124 = por %p122, %p123
      %p125 = scmp.ne.s32.totalorder %s117, %s119
      %p126 = scmp.eq.s32.totalorder %s22, 1
      %p127 = por %p125, %p126
      %p128 = scmp.ne.s32.totalorder %s119, %s120
      %p129 = scmp.eq.s32.totalorder %s22, 0
      %p130 = por %p128, %p129
      %p131 = scmp.ne.s32.totalorder %s119, %s120
      %p132 = scmp.eq.s32.totalorder %s23, 1
      %p133 = por %p131, %p132
      %p135 = scmp.ne.s32.totalorder %s120, %s134
      %p136 = scmp.eq.s32.totalorder %s23, 0
      %p137 = por %p135, %p136
      %s138 = ssub.s32 %s25, %s32
      %s139 = ssub.s32 %s24, %s36
      %s140 = sor.u32 %s138, %s139
      %p141 = scmp.eq.s32.totalorder %s140, 0
      %s143 = sadd.s32 %s142, 1
      %s144 = scalar_select %p141, %s142, %s143
      %p147 = pneg %p141
      %p148 = scmp.eq.s32.totalorder %s17, 1
      %p149 = por %p147, %p148
      %p150 = scmp.ne.s32.totalorder %s142, %s145
      %p151 = scmp.eq.s32.totalorder %s17, 0
      %p152 = por %p150, %p151
      %p153 = scmp.ne.s32.totalorder %s142, %s145
      %p154 = scmp.eq.s32.totalorder %s22, 1
      %p155 = por %p153, %p154
      %p156 = scmp.ne.s32.totalorder %s145, %s146
      %p157 = scmp.eq.s32.totalorder %s22, 0
      %p158 = por %p156, %p157
      %p159 = scmp.ne.s32.totalorder %s145, %s146
      %p160 = scmp.eq.s32.totalorder %s23, 1
      %p161 = por %p159, %p160
      %p163 = scmp.ne.s32.totalorder %s146, %s162
      %p164 = scmp.eq.s32.totalorder %s23, 0
      %p165 = por %p163, %p164
      %p166 = scmp.le.s32.totalorder 1, %s17
      %p167 = scmp.lt.s32.totalorder %s17, 3
      %p168 = pnand %p166, %p167
      %p169 = pneg %p168
      // Predicated region
      $region9: #{tpu_custom_call.1} parent=5 // pred_check
        _
      $region10: #{tpu_custom_call.1} parent=5 // pred_check_branch
        %171 = sbr.rel (%p168) target = $region12
      $region11: #{tpu_custom_call.1} parent=5 // pred_region
        %s172 = ssub.s32 %s17, 1
        // Predicated region
        $region13: #{tpu_custom_call.1} parent=11 // pred_check
          %p173 = pneg %p83
        $region14: #{tpu_custom_call.1} parent=11 // pred_check_branch
          %175 = sbr.rel (%p173) target = $region16
        $region15: #{tpu_custom_call.1} parent=11 // pred_region
          %s177 = ssub.s32 32, 32
          %178 = vsyncadd [#allocation6], %s177
          %s179 = smul.addr %s26, 32
          %s180 = scalar_lea.hbm %s1, %s179
          %s182 = sshll.u32 [#allocation5], 4
          %s183 = int_to_ptr.vmem [resolvable:$true] %s182
          %185 = dma.hbm_to_vmem [thread:$0]  %s180, 32, %s183, [#allocation6]
        $region16: #{tpu_custom_call.1} parent=11 // pred_fallthru
          _
        // Predicated region
        $region17: #{tpu_custom_call.1} parent=11 // pred_check
          %p186 = pneg %p109
        $region18: #{tpu_custom_call.1} parent=11 // pred_check_branch
          %188 = sbr.rel (%p186) target = $region20
        $region19: #{tpu_custom_call.1} parent=11 // pred_region
          %p189 = scmp.lt.s32.totalorder %s26, 0
          %s190 = scalar_select %p189, %s26, 0
          %s191 = smul.addr %s190, 2
          %s192 = scalar_lea.vmem %s2, %s191
        $region20: #{tpu_custom_call.1} parent=11 // pred_fallthru
          _
        // Predicated region
        $region21: #{tpu_custom_call.1} parent=11 // pred_check
          %p193 = pneg %p130
        $region22: #{tpu_custom_call.1} parent=11 // pred_check_branch
          %195 = sbr.rel (%p193) target = $region24
        $region23: #{tpu_custom_call.1} parent=11 // pred_region
          %s197 = ssub.s32 2048, 2048
          %198 = vsyncadd [#allocation6], %s197
          %s199 = sshll.u32 [#allocation7], 4
          %s200 = int_to_ptr.vmem [resolvable:$true] %s199
          %205 = dma.hbm_to_vmem [thread:$0]  %s3, 2048, %s200, [#allocation6], 128, 128, 8
        $region24: #{tpu_custom_call.1} parent=11 // pred_fallthru
          _
      $region12: #{tpu_custom_call.1} parent=5 // pred_fallthru
        _
      %p206 = scmp.lt.s32.totalorder %s17, 2
      // Predicated region
      $region25: #{tpu_custom_call.1} parent=5 // pred_check
        %p207 = pneg %p206
      $region26: #{tpu_custom_call.1} parent=5 // pred_check_branch
        %209 = sbr.rel (%p207) target = $region28
      $region27: #{tpu_custom_call.1} parent=5 // pred_region
        // Predicated region
        $region29: #{tpu_custom_call.1} parent=27 // pred_check
          %p210 = pneg %p51
        $region30: #{tpu_custom_call.1} parent=27 // pred_check_branch
          %212 = sbr.rel (%p210) target = $region32
        $region31: #{tpu_custom_call.1} parent=27 // pred_region
          %s213 = sand.u32 %s41, 1
          %s214 = scalar_lea.sflag [#allocation3], %s213
          %s215 = sand.u32 %s41, 1
          %s216 = smul.addr %s215, 8
          %s217 = scalar_lea.vmem [#allocation2], %s216
          %s218 = smul.u32 4, %s25
          %s220 = ssub.s32 128, 128
          %221 = vsyncadd %s214, %s220
          %s222 = sadd.s32 %s24, %s218
          %s223 = smul.addr %s222, 32
          %s224 = scalar_lea.hbm %s0, %s223
          %s225 = sshll.u32 %s217, 4
          %s226 = int_to_ptr.vmem [resolvable:$true] %s225
          %231 = dma.hbm_to_vmem [thread:$0]  %s224, 128, %s226, %s214, 32, 32, 2
        $region32: #{tpu_custom_call.1} parent=27 // pred_fallthru
          _
      $region28: #{tpu_custom_call.1} parent=5 // pred_fallthru
        _
      %p232 = scmp.le.s32.totalorder 1, %s17
      %p233 = scmp.lt.s32.totalorder %s17, 3
      %p234 = pnand %p232, %p233
      %p235 = pneg %p234
      // Predicated region
      $region33: #{tpu_custom_call.1} parent=5 // pred_check
        _
      $region34: #{tpu_custom_call.1} parent=5 // pred_check_branch
        %237 = sbr.rel (%p234) target = $region36
      $region35: #{tpu_custom_call.1} parent=5 // pred_region
        %s238 = ssub.s32 %s17, 1
        %s239 = sand.u32 %s44, 1
        %s240 = scalar_lea.sflag [#allocation3], %s239
        %s241 = sand.u32 %s44, 1
        %s242 = smul.addr %s241, 8
        %s243 = scalar_lea.vmem [#allocation2], %s242
        // Predicated region
        $region37: #{tpu_custom_call.1} parent=35 // pred_check
          %p244 = pneg %p57
        $region38: #{tpu_custom_call.1} parent=35 // pred_check_branch
          %246 = sbr.rel (%p244) target = $region40
        $region39: #{tpu_custom_call.1} parent=35 // pred_region
          %247 = dma.done %s240, 128
        $region40: #{tpu_custom_call.1} parent=35 // pred_fallthru
          _
        // Predicated region
        $region41: #{tpu_custom_call.1} parent=35 // pred_check
          %p248 = pneg %p83
        $region42: #{tpu_custom_call.1} parent=35 // pred_check_branch
          %250 = sbr.rel (%p248) target = $region44
        $region43: #{tpu_custom_call.1} parent=35 // pred_region
          %251 = dma.done [#allocation6], 32
        $region44: #{tpu_custom_call.1} parent=35 // pred_fallthru
          _
        // Predicated region
        $region45: #{tpu_custom_call.1} parent=35 // pred_check
          %p252 = pneg %p130
        $region46: #{tpu_custom_call.1} parent=35 // pred_check_branch
          %254 = sbr.rel (%p252) target = $region48
        $region47: #{tpu_custom_call.1} parent=35 // pred_region
          %255 = dma.done [#allocation6], 2048
        $region48: #{tpu_custom_call.1} parent=35 // pred_fallthru
          _
        %s256 = sand.u32 %s44, 1
        %s257 = scalar_lea.sflag [#allocation3], %s256
        %s258 = sand.u32 %s44, 1
        %s259 = smul.addr %s258, 8
        %s260 = scalar_lea.vmem [#allocation2], %s259
        %p261 = pneg %p57
        %p262 = pneg %p54
        %p263 = pneg %p83
        %p264 = pneg %p80
        %p265 = scmp.lt.s32.totalorder %s26, 0
        %s266 = scalar_select %p265, %s26, 0
        %s267 = smul.addr %s266, 2
        %s268 = scalar_lea.vmem %s2, %s267
        %p269 = pneg %p109
        %p270 = pneg %p106
        %p271 = pneg %p130
        %p272 = pneg %p127
        %p273 = pneg %p158
        %p274 = pneg %p155
        %s275 = sand.u32 %s145, 1
        %s276 = scalar_lea.sflag [#allocation4], %s275
        %s277 = sand.u32 %s145, 1
        %s278 = smul.addr %s277, 8
        %s279 = scalar_lea.vmem [#allocation8], %s278
        %s280 = smul.u32 4, %s27
        %p281 = scmp.lt.s32.totalorder %s26, 0
        %s282 = scalar_select %p281, %s26, 0
        %s283 = smul.addr %s282, 2
        %s284 = scalar_lea.vmem %s2, %s283
        %s285 = smul.u32 4, %s27
        %v286 = vld [vmem:[%s243] sm:$0x3]
        %v287 = vld [vmem:[%s243 + $0x2] sm:$0x3]
        %v288 = vld [vmem:[%s243 + $0x4] sm:$0x3]
        %v289 = vld [vmem:[%s243 + $0x6] sm:$0x3]
        %v290 = vld [vmem:[#allocation7] sm:$0xff]
        %v291 = vld [vmem:[#allocation7 + $0x8] sm:$0xff]
        %v292 = vld [vmem:[#allocation7 + $0x10] sm:$0xff]
        %v293 = vld [vmem:[#allocation7 + $0x18] sm:$0xff]
        %v294 = vld [vmem:[#allocation7 + $0x20] sm:$0xff]
        %v295 = vld [vmem:[#allocation7 + $0x28] sm:$0xff]
        %v296 = vld [vmem:[#allocation7 + $0x30] sm:$0xff]
        %v297 = vld [vmem:[#allocation7 + $0x38] sm:$0xff]
        %v298 = vld [vmem:[#allocation7 + $0x40] sm:$0xff]
        %v299 = vld [vmem:[#allocation7 + $0x48] sm:$0xff]
        %v300 = vld [vmem:[#allocation7 + $0x50] sm:$0xff]
        %v301 = vld [vmem:[#allocation7 + $0x58] sm:$0xff]
        %v302 = vld [vmem:[#allocation7 + $0x60] sm:$0xff]
        %v303 = vld [vmem:[#allocation7 + $0x68] sm:$0xff]
        %v304 = vld [vmem:[#allocation7 + $0x70] sm:$0xff]
        %v305 = vld [vmem:[#allocation7 + $0x78] sm:$0xff]
        %v310 = vcombine.low %v286, %v287
        %v311 = vcombine.low %v288, %v289
        %v313 = vunpack.c.l.s4 1983009808
        %v314 = vunpack.c.0.s8 %v313
        %v315 = vlaneseq
        %v316 = vshrl.u32 %v315, 7
        %v317 = vsub.s32 %v314, %v316
        %v318 = vrot.slane %v310, %v317
        %v320 = vunpack.c.l.s4 1983009808
        %v321 = vunpack.c.0.s8 %v320
        %v322 = vlaneseq
        %v323 = vshrl.u32 %v322, 7
        %v324 = vsub.s32 %v321, %v323
        %v325 = vrot.slane %v311, %v324
        %v326 = vcombine.low %v318, %v325
        %328 = vmatprep.subr.mxu0 0.0
        %v329 = vand.u32 %v305, 4294901760
        %330 = vmatpush1.msra.mxu0 %v329
        %331 = vmatprep.subr.mxu0 0.0
        %v332 = vand.u32 %v304, 4294901760
        %333 = vmatpush1.msra.mxu0 %v332
        %334 = vmatprep.subr.mxu0 0.0
        %v335 = vand.u32 %v303, 4294901760
        %336 = vmatpush1.msra.mxu0 %v335
        %337 = vmatprep.subr.mxu0 0.0
        %v338 = vand.u32 %v302, 4294901760
        %339 = vmatpush1.msra.mxu0 %v338
        %340 = vmatprep.subr.mxu0 0.0
        %v341 = vand.u32 %v301, 4294901760
        %342 = vmatpush1.msra.mxu0 %v341
        %343 = vmatprep.subr.mxu0 0.0
        %v344 = vand.u32 %v300, 4294901760
        %345 = vmatpush1.msra.mxu0 %v344
        %346 = vmatprep.subr.mxu0 0.0
        %v347 = vand.u32 %v299, 4294901760
        %348 = vmatpush1.msra.mxu0 %v347
        %349 = vmatprep.subr.mxu0 0.0
        %v350 = vand.u32 %v298, 4294901760
        %351 = vmatpush1.msra.mxu0 %v350
        %352 = vmatprep.subr.mxu0 0.0
        %v353 = vand.u32 %v297, 4294901760
        %354 = vmatpush1.msra.mxu0 %v353
        %355 = vmatprep.subr.mxu0 0.0
        %v356 = vand.u32 %v296, 4294901760
        %357 = vmatpush1.msra.mxu0 %v356
        %358 = vmatprep.subr.mxu0 0.0
        %v359 = vand.u32 %v295, 4294901760
        %360 = vmatpush1.msra.mxu0 %v359
        %361 = vmatprep.subr.mxu0 0.0
        %v362 = vand.u32 %v294, 4294901760
        %363 = vmatpush1.msra.mxu0 %v362
        %364 = vmatprep.subr.mxu0 0.0
        %v365 = vand.u32 %v293, 4294901760
        %366 = vmatpush1.msra.mxu0 %v365
        %367 = vmatprep.subr.mxu0 0.0
        %v368 = vand.u32 %v292, 4294901760
        %369 = vmatpush1.msra.mxu0 %v368
        %370 = vmatprep.subr.mxu0 0.0
        %v371 = vand.u32 %v291, 4294901760
        %372 = vmatpush1.msra.mxu0 %v371
        %373 = vmatprep.subr.mxu0 0.0
        %v374 = vand.u32 %v290, 4294901760
        %375 = vmatpush1.msra.mxu0 %v374
        %376 = vmatprep.subr.mxu0 0.0
        %377 = vmatpush2.msra.mxu0 0.0
        %378 = vmatprep.subr.mxu0 0.0
        %379 = vmatpush2.msra.mxu0 0.0
        %380 = vmatprep.subr.mxu0 0.0
        %381 = vmatpush2.msra.mxu0 0.0
        %382 = vmatprep.subr.mxu0 0.0
        %383 = vmatpush2.msra.mxu0 0.0
        %384 = vmatprep.subr.mxu0 0.0
        %385 = vmatpush2.msra.mxu0 0.0
        %386 = vmatprep.subr.mxu0 0.0
        %387 = vmatpush2.msra.mxu0 0.0
        %388 = vmatprep.subr.mxu0 0.0
        %389 = vmatpush2.msra.mxu0 0.0
        %390 = vmatprep.subr.mxu0 0.0
        %391 = vmatpush2.msra.mxu0 0.0
        %392 = vmatprep.subr.mxu0 0.0
        %393 = vmatpush2.msra.mxu0 0.0
        %394 = vmatprep.subr.mxu0 0.0
        %395 = vmatpush2.msra.mxu0 0.0
        %396 = vmatprep.subr.mxu0 0.0
        %397 = vmatpush2.msra.mxu0 0.0
        %398 = vmatprep.subr.mxu0 0.0
        %399 = vmatpush2.msra.mxu0 0.0
        %400 = vmatprep.subr.mxu0 0.0
        %401 = vmatpush2.msra.mxu0 0.0
        %402 = vmatprep.subr.mxu0 0.0
        %403 = vmatpush2.msra.mxu0 0.0
        %404 = vmatprep.subr.mxu0 0.0
        %405 = vmatpush2.msra.mxu0 0.0
        %406 = vmatprep.subr.mxu0 0.0
        %407 = vmatpush2.msra.mxu0 0.0
        %408 = vmatprep.mubr.f32.mxu0 0.0
        %v409 = vand.u32 %v326, 4294901760
        %v410 = vsub.f32 %v326, %v409
        %v411 = vand.u32 %v410, 4294901760
        %v412 = vsub.f32 %v410, %v411
        %v413 = vand.u32 %v412, 4294901760
        %414 = vmatmul.mubr.f32.gmra.mxu0 %v413
        %v415 = vpop.f32.mrf.mxu0
        %v416 = vadd.f32 0.0, %v415
        %v417 = vpop.f32.mrf.mxu0
        %418 = vdwg.mxu0
        %419 = vmatprep.subr.mxu0 0.0
        %v420 = vand.u32 %v305, 4294901760
        %v421 = vsub.f32 %v305, %v420
        %v422 = vand.u32 %v421, 4294901760
        %v423 = vsub.f32 %v421, %v422
        %v424 = vand.u32 %v423, 4294901760
        %425 = vmatpush1.msra.mxu0 %v424
        %426 = vmatprep.subr.mxu0 0.0
        %v427 = vand.u32 %v304, 4294901760
        %v428 = vsub.f32 %v304, %v427
        %v429 = vand.u32 %v428, 4294901760
        %v430 = vsub.f32 %v428, %v429
        %v431 = vand.u32 %v430, 4294901760
        %432 = vmatpush1.msra.mxu0 %v431
        %433 = vmatprep.subr.mxu0 0.0
        %v434 = vand.u32 %v303, 4294901760
        %v435 = vsub.f32 %v303, %v434
        %v436 = vand.u32 %v435, 4294901760
        %v437 = vsub.f32 %v435, %v436
        %v438 = vand.u32 %v437, 4294901760
        %439 = vmatpush1.msra.mxu0 %v438
        %440 = vmatprep.subr.mxu0 0.0
        %v441 = vand.u32 %v302, 4294901760
        %v442 = vsub.f32 %v302, %v441
        %v443 = vand.u32 %v442, 4294901760
        %v444 = vsub.f32 %v442, %v443
        %v445 = vand.u32 %v444, 4294901760
        %446 = vmatpush1.msra.mxu0 %v445
        %447 = vmatprep.subr.mxu0 0.0
        %v448 = vand.u32 %v301, 4294901760
        %v449 = vsub.f32 %v301, %v448
        %v450 = vand.u32 %v449, 4294901760
        %v451 = vsub.f32 %v449, %v450
        %v452 = vand.u32 %v451, 4294901760
        %453 = vmatpush1.msra.mxu0 %v452
        %454 = vmatprep.subr.mxu0 0.0
        %v455 = vand.u32 %v300, 4294901760
        %v456 = vsub.f32 %v300, %v455
        %v457 = vand.u32 %v456, 4294901760
        %v458 = vsub.f32 %v456, %v457
        %v459 = vand.u32 %v458, 4294901760
        %460 = vmatpush1.msra.mxu0 %v459
        %461 = vmatprep.subr.mxu0 0.0
        %v462 = vand.u32 %v299, 4294901760
        %v463 = vsub.f32 %v299, %v462
        %v464 = vand.u32 %v463, 4294901760
        %v465 = vsub.f32 %v463, %v464
        %v466 = vand.u32 %v465, 4294901760
        %467 = vmatpush1.msra.mxu0 %v466
        %468 = vmatprep.subr.mxu0 0.0
        %v469 = vand.u32 %v298, 4294901760
        %v470 = vsub.f32 %v298, %v469
        %v471 = vand.u32 %v470, 4294901760
        %v472 = vsub.f32 %v470, %v471
        %v473 = vand.u32 %v472, 4294901760
        %474 = vmatpush1.msra.mxu0 %v473
        %475 = vmatprep.subr.mxu0 0.0
        %v476 = vand.u32 %v297, 4294901760
        %v477 = vsub.f32 %v297, %v476
        %v478 = vand.u32 %v477, 4294901760
        %v479 = vsub.f32 %v477, %v478
        %v480 = vand.u32 %v479, 4294901760
        %481 = vmatpush1.msra.mxu0 %v480
        %482 = vmatprep.subr.mxu0 0.0
        %v483 = vand.u32 %v296, 4294901760
        %v484 = vsub.f32 %v296, %v483
        %v485 = vand.u32 %v484, 4294901760
        %v486 = vsub.f32 %v484, %v485
        %v487 = vand.u32 %v486, 4294901760
        %488 = vmatpush1.msra.mxu0 %v487
        %489 = vmatprep.subr.mxu0 0.0
        %v490 = vand.u32 %v295, 4294901760
        %v491 = vsub.f32 %v295, %v490
        %v492 = vand.u32 %v491, 4294901760
        %v493 = vsub.f32 %v491, %v492
        %v494 = vand.u32 %v493, 4294901760
        %495 = vmatpush1.msra.mxu0 %v494
        %496 = vmatprep.subr.mxu0 0.0
        %v497 = vand.u32 %v294, 4294901760
        %v498 = vsub.f32 %v294, %v497
        %v499 = vand.u32 %v498, 4294901760
        %v500 = vsub.f32 %v498, %v499
        %v501 = vand.u32 %v500, 4294901760
        %502 = vmatpush1.msra.mxu0 %v501
        %503 = vmatprep.subr.mxu0 0.0
        %v504 = vand.u32 %v293, 4294901760
        %v505 = vsub.f32 %v293, %v504
        %v506 = vand.u32 %v505, 4294901760
        %v507 = vsub.f32 %v505, %v506
        %v508 = vand.u32 %v507, 4294901760
        %509 = vmatpush1.msra.mxu0 %v508
        %510 = vmatprep.subr.mxu0 0.0
        %v511 = vand.u32 %v292, 4294901760
        %v512 = vsub.f32 %v292, %v511
        %v513 = vand.u32 %v512, 4294901760
        %v514 = vsub.f32 %v512, %v513
        %v515 = vand.u32 %v514, 4294901760
        %516 = vmatpush1.msra.mxu0 %v515
        %517 = vmatprep.subr.mxu0 0.0
        %v518 = vand.u32 %v291, 4294901760
        %v519 = vsub.f32 %v291, %v518
        %v520 = vand.u32 %v519, 4294901760
        %v521 = vsub.f32 %v519, %v520
        %v522 = vand.u32 %v521, 4294901760
        %523 = vmatpush1.msra.mxu0 %v522
        %524 = vmatprep.subr.mxu0 0.0
        %v525 = vand.u32 %v290, 4294901760
        %v526 = vsub.f32 %v290, %v525
        %v527 = vand.u32 %v526, 4294901760
        %v528 = vsub.f32 %v526, %v527
        %v529 = vand.u32 %v528, 4294901760
        %530 = vmatpush1.msra.mxu0 %v529
        %531 = vmatprep.subr.mxu0 0.0
        %532 = vmatpush2.msra.mxu0 0.0
        %533 = vmatprep.subr.mxu0 0.0
        %534 = vmatpush2.msra.mxu0 0.0
        %535 = vmatprep.subr.mxu0 0.0
        %536 = vmatpush2.msra.mxu0 0.0
        %537 = vmatprep.subr.mxu0 0.0
        %538 = vmatpush2.msra.mxu0 0.0
        %539 = vmatprep.subr.mxu0 0.0
        %540 = vmatpush2.msra.mxu0 0.0
        %541 = vmatprep.subr.mxu0 0.0
        %542 = vmatpush2.msra.mxu0 0.0
        %543 = vmatprep.subr.mxu0 0.0
        %544 = vmatpush2.msra.mxu0 0.0
        %545 = vmatprep.subr.mxu0 0.0
        %546 = vmatpush2.msra.mxu0 0.0
        %547 = vmatprep.subr.mxu0 0.0
        %548 = vmatpush2.msra.mxu0 0.0
        %549 = vmatprep.subr.mxu0 0.0
        %550 = vmatpush2.msra.mxu0 0.0
        %551 = vmatprep.subr.mxu0 0.0
        %552 = vmatpush2.msra.mxu0 0.0
        %553 = vmatprep.subr.mxu0 0.0
        %554 = vmatpush2.msra.mxu0 0.0
        %555 = vmatprep.subr.mxu0 0.0
        %556 = vmatpush2.msra.mxu0 0.0
        %557 = vmatprep.subr.mxu0 0.0
        %558 = vmatpush2.msra.mxu0 0.0
        %559 = vmatprep.subr.mxu0 0.0
        %560 = vmatpush2.msra.mxu0 0.0
        %561 = vmatprep.subr.mxu0 0.0
        %562 = vmatpush2.msra.mxu0 0.0
        %563 = vmatprep.mubr.f32.mxu0 0.0
        %v564 = vand.u32 %v326, 4294901760
        %565 = vmatmul.mubr.f32.gmra.mxu0 %v564
        %v566 = vpop.f32.mrf.mxu0
        %v567 = vadd.f32 %v416, %v566
        %v568 = vpop.f32.mrf.mxu0
        %569 = vdwg.mxu0
        %570 = vmatprep.subr.mxu0 0.0
        %v571 = vand.u32 %v305, 4294901760
        %v572 = vsub.f32 %v305, %v571
        %573 = vmatpush1.msra.mxu0 %v572
        %574 = vmatprep.subr.mxu0 0.0
        %v575 = vand.u32 %v304, 4294901760
        %v576 = vsub.f32 %v304, %v575
        %577 = vmatpush1.msra.mxu0 %v576
        %578 = vmatprep.subr.mxu0 0.0
        %v579 = vand.u32 %v303, 4294901760
        %v580 = vsub.f32 %v303, %v579
        %581 = vmatpush1.msra.mxu0 %v580
        %582 = vmatprep.subr.mxu0 0.0
        %v583 = vand.u32 %v302, 4294901760
        %v584 = vsub.f32 %v302, %v583
        %585 = vmatpush1.msra.mxu0 %v584
        %586 = vmatprep.subr.mxu0 0.0
        %v587 = vand.u32 %v301, 4294901760
        %v588 = vsub.f32 %v301, %v587
        %589 = vmatpush1.msra.mxu0 %v588
        %590 = vmatprep.subr.mxu0 0.0
        %v591 = vand.u32 %v300, 4294901760
        %v592 = vsub.f32 %v300, %v591
        %593 = vmatpush1.msra.mxu0 %v592
        %594 = vmatprep.subr.mxu0 0.0
        %v595 = vand.u32 %v299, 4294901760
        %v596 = vsub.f32 %v299, %v595
        %597 = vmatpush1.msra.mxu0 %v596
        %598 = vmatprep.subr.mxu0 0.0
        %v599 = vand.u32 %v298, 4294901760
        %v600 = vsub.f32 %v298, %v599
        %601 = vmatpush1.msra.mxu0 %v600
        %602 = vmatprep.subr.mxu0 0.0
        %v603 = vand.u32 %v297, 4294901760
        %v604 = vsub.f32 %v297, %v603
        %605 = vmatpush1.msra.mxu0 %v604
        %606 = vmatprep.subr.mxu0 0.0
        %v607 = vand.u32 %v296, 4294901760
        %v608 = vsub.f32 %v296, %v607
        %609 = vmatpush1.msra.mxu0 %v608
        %610 = vmatprep.subr.mxu0 0.0
        %v611 = vand.u32 %v295, 4294901760
        %v612 = vsub.f32 %v295, %v611
        %613 = vmatpush1.msra.mxu0 %v612
        %614 = vmatprep.subr.mxu0 0.0
        %v615 = vand.u32 %v294, 4294901760
        %v616 = vsub.f32 %v294, %v615
        %617 = vmatpush1.msra.mxu0 %v616
        %618 = vmatprep.subr.mxu0 0.0
        %v619 = vand.u32 %v293, 4294901760
        %v620 = vsub.f32 %v293, %v619
        %621 = vmatpush1.msra.mxu0 %v620
        %622 = vmatprep.subr.mxu0 0.0
        %v623 = vand.u32 %v292, 4294901760
        %v624 = vsub.f32 %v292, %v623
        %625 = vmatpush1.msra.mxu0 %v624
        %626 = vmatprep.subr.mxu0 0.0
        %v627 = vand.u32 %v291, 4294901760
        %v628 = vsub.f32 %v291, %v627
        %629 = vmatpush1.msra.mxu0 %v628
        %630 = vmatprep.subr.mxu0 0.0
        %v631 = vand.u32 %v290, 4294901760
        %v632 = vsub.f32 %v290, %v631
        %633 = vmatpush1.msra.mxu0 %v632
        %634 = vmatprep.subr.mxu0 0.0
        %635 = vmatpush2.msra.mxu0 0.0
        %636 = vmatprep.subr.mxu0 0.0
        %637 = vmatpush2.msra.mxu0 0.0
        %638 = vmatprep.subr.mxu0 0.0
        %639 = vmatpush2.msra.mxu0 0.0
        %640 = vmatprep.subr.mxu0 0.0
        %641 = vmatpush2.msra.mxu0 0.0
        %642 = vmatprep.subr.mxu0 0.0
        %643 = vmatpush2.msra.mxu0 0.0
        %644 = vmatprep.subr.mxu0 0.0
        %645 = vmatpush2.msra.mxu0 0.0
        %646 = vmatprep.subr.mxu0 0.0
        %647 = vmatpush2.msra.mxu0 0.0
        %648 = vmatprep.subr.mxu0 0.0
        %649 = vmatpush2.msra.mxu0 0.0
        %650 = vmatprep.subr.mxu0 0.0
        %651 = vmatpush2.msra.mxu0 0.0
        %652 = vmatprep.subr.mxu0 0.0
        %653 = vmatpush2.msra.mxu0 0.0
        %654 = vmatprep.subr.mxu0 0.0
        %655 = vmatpush2.msra.mxu0 0.0
        %656 = vmatprep.subr.mxu0 0.0
        %657 = vmatpush2.msra.mxu0 0.0
        %658 = vmatprep.subr.mxu0 0.0
        %659 = vmatpush2.msra.mxu0 0.0
        %660 = vmatprep.subr.mxu0 0.0
        %661 = vmatpush2.msra.mxu0 0.0
        %662 = vmatprep.subr.mxu0 0.0
        %663 = vmatpush2.msra.mxu0 0.0
        %664 = vmatprep.subr.mxu0 0.0
        %665 = vmatpush2.msra.mxu0 0.0
        %666 = vmatprep.mubr.f32.mxu0 0.0
        %v667 = vand.u32 %v326, 4294901760
        %v668 = vsub.f32 %v326, %v667
        %669 = vmatmul.mubr.f32.gmra.mxu0 %v668
        %v670 = vpop.f32.mrf.mxu0
        %v671 = vadd.f32 %v567, %v670
        %v672 = vpop.f32.mrf.mxu0
        %673 = vdwg.mxu0
        %674 = vmatprep.subr.mxu0 0.0
        %v675 = vand.u32 %v305, 4294901760
        %676 = vmatpush1.msra.mxu0 %v675
        %677 = vmatprep.subr.mxu0 0.0
        %v678 = vand.u32 %v304, 4294901760
        %679 = vmatpush1.msra.mxu0 %v678
        %680 = vmatprep.subr.mxu0 0.0
        %v681 = vand.u32 %v303, 4294901760
        %682 = vmatpush1.msra.mxu0 %v681
        %683 = vmatprep.subr.mxu0 0.0
        %v684 = vand.u32 %v302, 4294901760
        %685 = vmatpush1.msra.mxu0 %v684
        %686 = vmatprep.subr.mxu0 0.0
        %v687 = vand.u32 %v301, 4294901760
        %688 = vmatpush1.msra.mxu0 %v687
        %689 = vmatprep.subr.mxu0 0.0
        %v690 = vand.u32 %v300, 4294901760
        %691 = vmatpush1.msra.mxu0 %v690
        %692 = vmatprep.subr.mxu0 0.0
        %v693 = vand.u32 %v299, 4294901760
        %694 = vmatpush1.msra.mxu0 %v693
        %695 = vmatprep.subr.mxu0 0.0
        %v696 = vand.u32 %v298, 4294901760
        %697 = vmatpush1.msra.mxu0 %v696
        %698 = vmatprep.subr.mxu0 0.0
        %v699 = vand.u32 %v297, 4294901760
        %700 = vmatpush1.msra.mxu0 %v699
        %701 = vmatprep.subr.mxu0 0.0
        %v702 = vand.u32 %v296, 4294901760
        %703 = vmatpush1.msra.mxu0 %v702
        %704 = vmatprep.subr.mxu0 0.0
        %v705 = vand.u32 %v295, 4294901760
        %706 = vmatpush1.msra.mxu0 %v705
        %707 = vmatprep.subr.mxu0 0.0
        %v708 = vand.u32 %v294, 4294901760
        %709 = vmatpush1.msra.mxu0 %v708
        %710 = vmatprep.subr.mxu0 0.0
        %v711 = vand.u32 %v293, 4294901760
        %712 = vmatpush1.msra.mxu0 %v711
        %713 = vmatprep.subr.mxu0 0.0
        %v714 = vand.u32 %v292, 4294901760
        %715 = vmatpush1.msra.mxu0 %v714
        %716 = vmatprep.subr.mxu0 0.0
        %v717 = vand.u32 %v291, 4294901760
        %718 = vmatpush1.msra.mxu0 %v717
        %719 = vmatprep.subr.mxu0 0.0
        %v720 = vand.u32 %v290, 4294901760
        %721 = vmatpush1.msra.mxu0 %v720
        %722 = vmatprep.subr.mxu0 0.0
        %723 = vmatpush2.msra.mxu0 0.0
        %724 = vmatprep.subr.mxu0 0.0
        %725 = vmatpush2.msra.mxu0 0.0
        %726 = vmatprep.subr.mxu0 0.0
        %727 = vmatpush2.msra.mxu0 0.0
        %728 = vmatprep.subr.mxu0 0.0
        %729 = vmatpush2.msra.mxu0 0.0
        %730 = vmatprep.subr.mxu0 0.0
        %731 = vmatpush2.msra.mxu0 0.0
        %732 = vmatprep.subr.mxu0 0.0
        %733 = vmatpush2.msra.mxu0 0.0
        %734 = vmatprep.subr.mxu0 0.0
        %735 = vmatpush2.msra.mxu0 0.0
        %736 = vmatprep.subr.mxu0 0.0
        %737 = vmatpush2.msra.mxu0 0.0
        %738 = vmatprep.subr.mxu0 0.0
        %739 = vmatpush2.msra.mxu0 0.0
        %740 = vmatprep.subr.mxu0 0.0
        %741 = vmatpush2.msra.mxu0 0.0
        %742 = vmatprep.subr.mxu0 0.0
        %743 = vmatpush2.msra.mxu0 0.0
        %744 = vmatprep.subr.mxu0 0.0
        %745 = vmatpush2.msra.mxu0 0.0
        %746 = vmatprep.subr.mxu0 0.0
        %747 = vmatpush2.msra.mxu0 0.0
        %748 = vmatprep.subr.mxu0 0.0
        %749 = vmatpush2.msra.mxu0 0.0
        %750 = vmatprep.subr.mxu0 0.0
        %751 = vmatpush2.msra.mxu0 0.0
        %752 = vmatprep.subr.mxu0 0.0
        %753 = vmatpush2.msra.mxu0 0.0
        %754 = vmatprep.mubr.f32.mxu0 0.0
        %v755 = vand.u32 %v326, 4294901760
        %v756 = vsub.f32 %v326, %v755
        %v757 = vand.u32 %v756, 4294901760
        %758 = vmatmul.mubr.f32.gmra.mxu0 %v757
        %v759 = vpop.f32.mrf.mxu0
        %v760 = vadd.f32 %v671, %v759
        %v761 = vpop.f32.mrf.mxu0
        %762 = vdwg.mxu0
        %763 = vmatprep.subr.mxu0 0.0
        %v764 = vand.u32 %v305, 4294901760
        %v765 = vsub.f32 %v305, %v764
        %v766 = vand.u32 %v765, 4294901760
        %767 = vmatpush1.msra.mxu0 %v766
        %768 = vmatprep.subr.mxu0 0.0
        %v769 = vand.u32 %v304, 4294901760
        %v770 = vsub.f32 %v304, %v769
        %v771 = vand.u32 %v770, 4294901760
        %772 = vmatpush1.msra.mxu0 %v771
        %773 = vmatprep.subr.mxu0 0.0
        %v774 = vand.u32 %v303, 4294901760
        %v775 = vsub.f32 %v303, %v774
        %v776 = vand.u32 %v775, 4294901760
        %777 = vmatpush1.msra.mxu0 %v776
        %778 = vmatprep.subr.mxu0 0.0
        %v779 = vand.u32 %v302, 4294901760
        %v780 = vsub.f32 %v302, %v779
        %v781 = vand.u32 %v780, 4294901760
        %782 = vmatpush1.msra.mxu0 %v781
        %783 = vmatprep.subr.mxu0 0.0
        %v784 = vand.u32 %v301, 4294901760
        %v785 = vsub.f32 %v301, %v784
        %v786 = vand.u32 %v785, 4294901760
        %787 = vmatpush1.msra.mxu0 %v786
        %788 = vmatprep.subr.mxu0 0.0
        %v789 = vand.u32 %v300, 4294901760
        %v790 = vsub.f32 %v300, %v789
        %v791 = vand.u32 %v790, 4294901760
        %792 = vmatpush1.msra.mxu0 %v791
        %793 = vmatprep.subr.mxu0 0.0
        %v794 = vand.u32 %v299, 4294901760
        %v795 = vsub.f32 %v299, %v794
        %v796 = vand.u32 %v795, 4294901760
        %797 = vmatpush1.msra.mxu0 %v796
        %798 = vmatprep.subr.mxu0 0.0
        %v799 = vand.u32 %v298, 4294901760
        %v800 = vsub.f32 %v298, %v799
        %v801 = vand.u32 %v800, 4294901760
        %802 = vmatpush1.msra.mxu0 %v801
        %803 = vmatprep.subr.mxu0 0.0
        %v804 = vand.u32 %v297, 4294901760
        %v805 = vsub.f32 %v297, %v804
        %v806 = vand.u32 %v805, 4294901760
        %807 = vmatpush1.msra.mxu0 %v806
        %808 = vmatprep.subr.mxu0 0.0
        %v809 = vand.u32 %v296, 4294901760
        %v810 = vsub.f32 %v296, %v809
        %v811 = vand.u32 %v810, 4294901760
        %812 = vmatpush1.msra.mxu0 %v811
        %813 = vmatprep.subr.mxu0 0.0
        %v814 = vand.u32 %v295, 4294901760
        %v815 = vsub.f32 %v295, %v814
        %v816 = vand.u32 %v815, 4294901760
        %817 = vmatpush1.msra.mxu0 %v816
        %818 = vmatprep.subr.mxu0 0.0
        %v819 = vand.u32 %v294, 4294901760
        %v820 = vsub.f32 %v294, %v819
        %v821 = vand.u32 %v820, 4294901760
        %822 = vmatpush1.msra.mxu0 %v821
        %823 = vmatprep.subr.mxu0 0.0
        %v824 = vand.u32 %v293, 4294901760
        %v825 = vsub.f32 %v293, %v824
        %v826 = vand.u32 %v825, 4294901760
        %827 = vmatpush1.msra.mxu0 %v826
        %828 = vmatprep.subr.mxu0 0.0
        %v829 = vand.u32 %v292, 4294901760
        %v830 = vsub.f32 %v292, %v829
        %v831 = vand.u32 %v830, 4294901760
        %832 = vmatpush1.msra.mxu0 %v831
        %833 = vmatprep.subr.mxu0 0.0
        %v834 = vand.u32 %v291, 4294901760
        %v835 = vsub.f32 %v291, %v834
        %v836 = vand.u32 %v835, 4294901760
        %837 = vmatpush1.msra.mxu0 %v836
        %838 = vmatprep.subr.mxu0 0.0
        %v839 = vand.u32 %v290, 4294901760
        %v840 = vsub.f32 %v290, %v839
        %v841 = vand.u32 %v840, 4294901760
        %842 = vmatpush1.msra.mxu0 %v841
        %843 = vmatprep.subr.mxu0 0.0
        %844 = vmatpush2.msra.mxu0 0.0
        %845 = vmatprep.subr.mxu0 0.0
        %846 = vmatpush2.msra.mxu0 0.0
        %847 = vmatprep.subr.mxu0 0.0
        %848 = vmatpush2.msra.mxu0 0.0
        %849 = vmatprep.subr.mxu0 0.0
        %850 = vmatpush2.msra.mxu0 0.0
        %851 = vmatprep.subr.mxu0 0.0
        %852 = vmatpush2.msra.mxu0 0.0
        %853 = vmatprep.subr.mxu0 0.0
        %854 = vmatpush2.msra.mxu0 0.0
        %855 = vmatprep.subr.mxu0 0.0
        %856 = vmatpush2.msra.mxu0 0.0
        %857 = vmatprep.subr.mxu0 0.0
        %858 = vmatpush2.msra.mxu0 0.0
        %859 = vmatprep.subr.mxu0 0.0
        %860 = vmatpush2.msra.mxu0 0.0
        %861 = vmatprep.subr.mxu0 0.0
        %862 = vmatpush2.msra.mxu0 0.0
        %863 = vmatprep.subr.mxu0 0.0
        %864 = vmatpush2.msra.mxu0 0.0
        %865 = vmatprep.subr.mxu0 0.0
        %866 = vmatpush2.msra.mxu0 0.0
        %867 = vmatprep.subr.mxu0 0.0
        %868 = vmatpush2.msra.mxu0 0.0
        %869 = vmatprep.subr.mxu0 0.0
        %870 = vmatpush2.msra.mxu0 0.0
        %871 = vmatprep.subr.mxu0 0.0
        %872 = vmatpush2.msra.mxu0 0.0
        %873 = vmatprep.subr.mxu0 0.0
        %874 = vmatpush2.msra.mxu0 0.0
        %875 = vmatprep.mubr.f32.mxu0 0.0
        %v876 = vand.u32 %v326, 4294901760
        %877 = vmatmul.mubr.f32.gmra.mxu0 %v876
        %v878 = vpop.f32.mrf.mxu0
        %v879 = vadd.f32 %v760, %v878
        %v880 = vpop.f32.mrf.mxu0
        %881 = vdwg.mxu0
        %882 = vmatprep.subr.mxu0 0.0
        %v883 = vand.u32 %v305, 4294901760
        %884 = vmatpush1.msra.mxu0 %v883
        %885 = vmatprep.subr.mxu0 0.0
        %v886 = vand.u32 %v304, 4294901760
        %887 = vmatpush1.msra.mxu0 %v886
        %888 = vmatprep.subr.mxu0 0.0
        %v889 = vand.u32 %v303, 4294901760
        %890 = vmatpush1.msra.mxu0 %v889
        %891 = vmatprep.subr.mxu0 0.0
        %v892 = vand.u32 %v302, 4294901760
        %893 = vmatpush1.msra.mxu0 %v892
        %894 = vmatprep.subr.mxu0 0.0
        %v895 = vand.u32 %v301, 4294901760
        %896 = vmatpush1.msra.mxu0 %v895
        %897 = vmatprep.subr.mxu0 0.0
        %v898 = vand.u32 %v300, 4294901760
        %899 = vmatpush1.msra.mxu0 %v898
        %900 = vmatprep.subr.mxu0 0.0
        %v901 = vand.u32 %v299, 4294901760
        %902 = vmatpush1.msra.mxu0 %v901
        %903 = vmatprep.subr.mxu0 0.0
        %v904 = vand.u32 %v298, 4294901760
        %905 = vmatpush1.msra.mxu0 %v904
        %906 = vmatprep.subr.mxu0 0.0
        %v907 = vand.u32 %v297, 4294901760
        %908 = vmatpush1.msra.mxu0 %v907
        %909 = vmatprep.subr.mxu0 0.0
        %v910 = vand.u32 %v296, 4294901760
        %911 = vmatpush1.msra.mxu0 %v910
        %912 = vmatprep.subr.mxu0 0.0
        %v913 = vand.u32 %v295, 4294901760
        %914 = vmatpush1.msra.mxu0 %v913
        %915 = vmatprep.subr.mxu0 0.0
        %v916 = vand.u32 %v294, 4294901760
        %917 = vmatpush1.msra.mxu0 %v916
        %918 = vmatprep.subr.mxu0 0.0
        %v919 = vand.u32 %v293, 4294901760
        %920 = vmatpush1.msra.mxu0 %v919
        %921 = vmatprep.subr.mxu0 0.0
        %v922 = vand.u32 %v292, 4294901760
        %923 = vmatpush1.msra.mxu0 %v922
        %924 = vmatprep.subr.mxu0 0.0
        %v925 = vand.u32 %v291, 4294901760
        %926 = vmatpush1.msra.mxu0 %v925
        %927 = vmatprep.subr.mxu0 0.0
        %v928 = vand.u32 %v290, 4294901760
        %929 = vmatpush1.msra.mxu0 %v928
        %930 = vmatprep.subr.mxu0 0.0
        %931 = vmatpush2.msra.mxu0 0.0
        %932 = vmatprep.subr.mxu0 0.0
        %933 = vmatpush2.msra.mxu0 0.0
        %934 = vmatprep.subr.mxu0 0.0
        %935 = vmatpush2.msra.mxu0 0.0
        %936 = vmatprep.subr.mxu0 0.0
        %937 = vmatpush2.msra.mxu0 0.0
        %938 = vmatprep.subr.mxu0 0.0
        %939 = vmatpush2.msra.mxu0 0.0
        %940 = vmatprep.subr.mxu0 0.0
        %941 = vmatpush2.msra.mxu0 0.0
        %942 = vmatprep.subr.mxu0 0.0
        %943 = vmatpush2.msra.mxu0 0.0
        %944 = vmatprep.subr.mxu0 0.0
        %945 = vmatpush2.msra.mxu0 0.0
        %946 = vmatprep.subr.mxu0 0.0
        %947 = vmatpush2.msra.mxu0 0.0
        %948 = vmatprep.subr.mxu0 0.0
        %949 = vmatpush2.msra.mxu0 0.0
        %950 = vmatprep.subr.mxu0 0.0
        %951 = vmatpush2.msra.mxu0 0.0
        %952 = vmatprep.subr.mxu0 0.0
        %953 = vmatpush2.msra.mxu0 0.0
        %954 = vmatprep.subr.mxu0 0.0
        %955 = vmatpush2.msra.mxu0 0.0
        %956 = vmatprep.subr.mxu0 0.0
        %957 = vmatpush2.msra.mxu0 0.0
        %958 = vmatprep.subr.mxu0 0.0
        %959 = vmatpush2.msra.mxu0 0.0
        %960 = vmatprep.subr.mxu0 0.0
        %961 = vmatpush2.msra.mxu0 0.0
        %962 = vmatprep.mubr.f32.mxu0 0.0
        %v963 = vand.u32 %v326, 4294901760
        %964 = vmatmul.mubr.f32.gmra.mxu0 %v963
        %v965 = vpop.f32.mrf.mxu0
        %v966 = vadd.f32 %v879, %v965
        %v967 = vpop.f32.mrf.mxu0
        %968 = vdwg.mxu0
        %v970 = vcombine.high %v966, %v966
        %v972 = vunpack.c.l.s4 1983009808
        %v973 = vunpack.c.0.s8 %v972
        %v974 = vlaneseq
        %v975 = vshrl.u32 %v974, 7
        %v976 = vsub.s32 %v973, %v975
        %v977 = vrot.slane %v966, %v976
        %v979 = vunpack.c.l.s4 1983009808
        %v980 = vunpack.c.0.s8 %v979
        %v981 = vlaneseq
        %v982 = vshrl.u32 %v981, 7
        %v983 = vsub.s32 %v980, %v982
        %v984 = vrot.slane %v970, %v983
        %v985 = vcombine.high %v977, %v977
        %v986 = vcombine.high %v984, %v984
        %v991 = vld [vmem:[#allocation5] sm:$0x3]
        %v992 = vmul.f32 %v286, %v991
        %v993 = vmul.f32 %v287, %v991
        %v994 = vmul.f32 %v288, %v991
        %v995 = vmul.f32 %v289, %v991
        %v996 = vld [vmem:[%s284] sm:$0x3]
        %v997 = vmul.f32 %v977, %v996
        %v998 = vmul.f32 %v985, %v996
        %v999 = vmul.f32 %v984, %v996
        %v1000 = vmul.f32 %v986, %v996
        %v1001 = vadd.f32 %v992, %v997
        %v1002 = vadd.f32 %v993, %v998
        %v1003 = vadd.f32 %v994, %v999
        %v1004 = vadd.f32 %v995, %v1000
        %1005 = vst [vmem:[%s279] sm:$0x3] %v1001
        %1006 = vst [vmem:[%s279 + $0x2] sm:$0x3] %v1002
        %1007 = vst [vmem:[%s279 + $0x4] sm:$0x3] %v1003
        %1008 = vst [vmem:[%s279 + $0x6] sm:$0x3] %v1004
        %s1009 = sand.u32 %s145, 1
        %s1010 = scalar_lea.sflag [#allocation4], %s1009
        %s1011 = sand.u32 %s145, 1
        %s1012 = smul.addr %s1011, 8
        %s1013 = scalar_lea.vmem [#allocation8], %s1012
        // Predicated region
        $region49: #{tpu_custom_call.1} parent=35 // pred_check
          %p1014 = pneg %p155
        $region50: #{tpu_custom_call.1} parent=35 // pred_check_branch
          %1016 = sbr.rel (%p1014) target = $region52
        $region51: #{tpu_custom_call.1} parent=35 // pred_region
          %s1017 = smul.u32 4, %s27
          %s1019 = ssub.s32 128, 128
          %1020 = vsyncadd %s1010, %s1019
          %s1021 = sadd.s32 %s26, %s1017
          %s1022 = smul.addr %s1021, 32
          %s1023 = scalar_lea.hbm %s4, %s1022
          %s1024 = sshll.u32 %s1013, 4
          %s1025 = int_to_ptr.vmem [resolvable:$true] %s1024
          %1030 = dma.vmem_to_hbm [thread:$0]  %s1025, 128, %s1023, %s1010, 32, 32, 2
        $region52: #{tpu_custom_call.1} parent=35 // pred_fallthru
          _
      $region36: #{tpu_custom_call.1} parent=5 // pred_fallthru
        _
      %p1031 = scmp.le.s32.totalorder 2, %s17
      // Predicated region
      $region53: #{tpu_custom_call.1} parent=5 // pred_check
        %p1032 = pneg %p1031
      $region54: #{tpu_custom_call.1} parent=5 // pred_check_branch
        %1034 = sbr.rel (%p1032) target = $region56
      $region55: #{tpu_custom_call.1} parent=5 // pred_region
        %s1035 = ssub.s32 %s17, 2
        // Predicated region
        $region57: #{tpu_custom_call.1} parent=55 // pred_check
          %p1036 = pneg %p161
        $region58: #{tpu_custom_call.1} parent=55 // pred_check_branch
          %1038 = sbr.rel (%p1036) target = $region60
        $region59: #{tpu_custom_call.1} parent=55 // pred_region
          %s1039 = sand.u32 %s146, 1
          %s1040 = scalar_lea.sflag [#allocation4], %s1039
          %s1041 = sand.u32 %s146, 1
          %s1042 = smul.addr %s1041, 8
          %s1043 = scalar_lea.vmem [#allocation8], %s1042
          %1044 = dma.done %s1040, 128
        $region60: #{tpu_custom_call.1} parent=55 // pred_fallthru
          _
      $region56: #{tpu_custom_call.1} parent=5 // pred_fallthru
        _
    $region6: #{tpu_custom_call.1} parent=1 // loop_footer
      %s21 = sadd.s32 1, %s17
    $region7: #{tpu_custom_call.1} parent=1 // loop_footer_branch
      %16 = sbr.rel target = $region3
    $region8: #{tpu_custom_call.1} parent=1 // loop_exit
      _
    %1045 = vsyncpa [#allocation3], 1
    %s1046 = scalar_lea.sflag [#allocation3], 1
    %1047 = vsyncpa %s1046, 1
    %1048 = vsyncpa [#allocation6], 1
    %1049 = vsyncpa [#allocation4], 1
    %s1050 = scalar_lea.sflag [#allocation4], 1
    %1051 = vsyncpa %s1050, 1

</llo_original>
